<compile_context>
chip_gen: v5e
topology: v5e:2x2
jax: 0.10.0
libtpu: 0.0.40
codegen_flags: <defaults>
</compile_context>

<pallas_src>
import math

import jax
import jax.numpy as jnp
from jax.experimental import pallas as pl
from jax.experimental.pallas import tpu as pltpu

TAU = 0.7
INV_TAU = 1.0 / TAU
EPS = 1e-12  # F.normalize default eps


def make_bt_loss_fn(N, H):
    assert N % 8 == 0, "N must be a multiple of 8 (sublane-aligned row split of g)"
    assert H % 8 == 0, "H must be a multiple of 8 (packed-params row offsets)"
    H2 = 2 * H
    BPAD = 16                     # bias rows padded to a bf16 sublane tile
    OFF_W1 = 0
    OFF_B1 = H
    OFF_W2 = H + BPAD
    OFF_B2 = OFF_W2 + H2
    TOTAL_ROWS = OFF_B2 + BPAD    # = 3H + 32

    def kernel(z_ref, p_ref, perm_ref, out_ref):
        z = z_ref[0].astype(jnp.bfloat16)                     # (2N, H): [z1; z2]
        W1 = p_ref[OFF_W1:OFF_W1 + H, :]                      # (H, 2H) bf16 [w1a_t | w2a_t]
        b1 = p_ref[OFF_B1:OFF_B1 + 1, :].astype(jnp.float32)  # (1, 2H)
        W2 = p_ref[OFF_W2:OFF_W2 + H2, :]                     # (2H, 2H) bf16 blockdiag
        b2 = p_ref[OFF_B2:OFF_B2 + 1, :].astype(jnp.float32)  # (1, 2H)

        # Both reward MLP branches: ONE MXU matmul per layer (bf16 ops, f32 acc).
        h = jnp.dot(z, W1, preferred_element_type=jnp.float32) + b1
        h = jnp.maximum(h, 0.0)
        g = jnp.dot(h.astype(jnp.bfloat16), W2,
                    preferred_element_type=jnp.float32) + b2          # (2N, 2H)

        h1 = g[:N, :H]                                        # reward1(z1)
        h2 = g[N:, H:]                                        # reward2(z2)

        # F.normalize: x / max(||x||, eps) == x * rsqrt(max(||x||^2, eps^2))
        def normalize(x):
            ss = jnp.sum(x * x, axis=1, keepdims=True)
            return x * jax.lax.rsqrt(jnp.maximum(ss, EPS * EPS))

        n1 = normalize(h1)                                    # (N, H) f32
        n2 = normalize(h2)                                    # (N, H) f32

        # Positive similarity straight from the row-wise product (no Gram diagonal).
        s_pos = jnp.sum(n1 * n2, axis=1, keepdims=True)       # (N, 1)

        # Single (N, N) similarity matrix: S[i, j] = n1[i] . n2[j].
        S = jax.lax.dot_general(n1.astype(jnp.bfloat16), n2.astype(jnp.bfloat16),
                                (((1,), (1,)), ((), ())),
                                preferred_element_type=jnp.float32)   # (N, N)

        cols = jax.lax.broadcasted_iota(jnp.int32, (N, N), 1)
        perm = perm_ref[0]                                    # (N, 1) int32
        sel = cols == perm                                    # sel[i, j] = (j == perm[i])

        # nega1[i] = S[i, perm[i]];  nega2[i] = S[perm[i], i] = S.T[i, perm[i]]
        s_neg1 = jnp.sum(jnp.where(sel, S, 0.0), axis=1, keepdims=True)    # (N, 1)
        s_neg2 = jnp.sum(jnp.where(sel, S.T, 0.0), axis=1, keepdims=True)  # (N, 1)

        pref = jnp.exp(s_pos * INV_TAU)
        den = pref + pref + jnp.exp(s_neg1 * INV_TAU) + jnp.exp(s_neg2 * INV_TAU)
        # -log(pref / den) == log(den) - s_pos / tau   (exact; no reciprocal)
        loss = jnp.log(den) - s_pos * INV_TAU                 # (N, 1)

        out_ref[0] = jnp.sum(loss, axis=0, keepdims=True) * (1.0 / N)   # (1, 1)

    def _build_call(B):
        return pl.pallas_call(
            kernel,
            out_shape=jax.ShapeDtypeStruct((B, 1, 1), jnp.float32),
            grid=(B,),
            in_specs=[
                pl.BlockSpec((1, 2 * N, H), lambda b: (b, 0, 0)),         # z (per problem)
                pl.BlockSpec((TOTAL_ROWS, H2), lambda b: (0, 0)),         # params (shared)
                pl.BlockSpec((1, N, 1), lambda b: (b, 0, 0)),             # perm (per problem)
            ],
            out_specs=pl.BlockSpec((1, 1, 1), lambda b: (b, 0, 0)),
            compiler_params=pltpu.CompilerParams(
                dimension_semantics=("parallel",),
                vmem_limit_bytes=32 * 1024 * 1024),
        )

    def pack_params(w1a_t, b1a, w1b_t, b1b, w2a_t, b2a, w2b_t, b2b):
        zero = jnp.zeros((H, H), jnp.float32)
        W1 = jnp.concatenate([w1a_t, w2a_t], axis=1)                    # (H, 2H)
        b1 = jnp.concatenate([b1a, b2a], axis=1)                        # (1, 2H)
        W2 = jnp.concatenate(
            [jnp.concatenate([w1b_t, zero], axis=1),
             jnp.concatenate([zero, w2b_t], axis=1)], axis=0)           # (2H, 2H)
        b2 = jnp.concatenate([b1b, b2b], axis=1)                        # (1, 2H)
        pad = lambda x: jnp.pad(x, ((0, BPAD - x.shape[0]), (0, 0)))
        packed = jnp.concatenate([W1, pad(b1), W2, pad(b2)], axis=0)    # (3H+32, 2H)
        assert packed.shape == (TOTAL_ROWS, H2)
        return packed.astype(jnp.bfloat16)

    @jax.jit
    def batched_loss_fn(z1, z2, packed, perm_idx):
        """z1, z2: (B, N, H) f32; perm_idx: (B, N) int -> (B,) losses."""
        B = z1.shape[0]
        z = jnp.concatenate([z1, z2], axis=1)                 # (B, 2N, H)
        perm_col = perm_idx.astype(jnp.int32).reshape(B, N, 1)
        out = _build_call(B)(z, packed, perm_col)             # (B, 1, 1)
        return out[:, 0, 0]

    def loss_fn(z1, z2, packed, perm_idx):
        """Single-problem path matching BTModel.forward: scalar loss."""
        return batched_loss_fn(z1[None], z2[None], packed, perm_idx[None])[0]

    return pack_params, loss_fn, batched_loss_fn


def init_linear(key, h):
    """Deterministic torch.nn.Linear-style init: U(-1/sqrt(fan_in), 1/sqrt(fan_in))."""
    k_w, k_b = jax.random.split(key)
    bound = 1.0 / math.sqrt(h)
    w = jax.random.uniform(k_w, (h, h), jnp.float32, -bound, bound)  # (H_out, H_in)
    b = jax.random.uniform(k_b, (1, h), jnp.float32, -bound, bound)
    return w.T, b  # pre-transposed to (H_in, H_out)


def reference_loss(z1, z2, weights, perm_idx):
    """Pure-JAX f32 reference with the exact BTModel.forward semantics."""
    w1a_t, b1a, w1b_t, b1b, w2a_t, b2a, w2b_t, b2b = weights

    def mlp(x, wa, ba, wb, bb):
        return jnp.maximum(x @ wa + ba, 0.0) @ wb + bb

    def normalize(x):
        n = jnp.sqrt(jnp.sum(x * x, axis=1, keepdims=True))
        return x / jnp.maximum(n, EPS)

    h1 = mlp(z1, w1a_t, b1a, w1b_t, b1b)
    h2 = mlp(z2, w2a_t, b2a, w2b_t, b2b)
    n1, n2 = normalize(h1), normalize(h2)
    f = lambda s: jnp.exp(s / TAU)
    pref = f(jnp.sum(n1 * n2, axis=1))
    nega = f(jnp.sum(n1 * n2[perm_idx], axis=1)) + f(jnp.sum(n2 * n1[perm_idx], axis=1))
    return jnp.mean(-jnp.log(pref / (pref + pref + nega)))


if __name__ == "__main__":
    N, H = 8, 32   # batch (per problem), num_hidden
    B = 4          # independent problems per pallas_call (parallel grid axis)

    key = jax.random.PRNGKey(0)
    kz1, kz2, kperm, k1, k2, k3, k4 = jax.random.split(key, 7)

    z1 = jax.random.normal(kz1, (B, N, H), jnp.float32)
    z2 = jax.random.normal(kz2, (B, N, H), jnp.float32)

    w1a_t, b1a = init_linear(k1, H)
    w1b_t, b1b = init_linear(k2, H)
    w2a_t, b2a = init_linear(k3, H)
    w2b_t, b2b = init_linear(k4, H)
    weights = (w1a_t, b1a, w1b_t, b1b, w2a_t, b2a, w2b_t, b2b)

    # torch.randperm -> deterministic permutation indices (O(N), hoisted to an input).
    perm_idx = jnp.stack(
        [jax.random.permutation(jax.random.fold_in(kperm, i), N) for i in range(B)]
    )  # (B, N) int32

    pack_params, loss_fn, batched_loss_fn = make_bt_loss_fn(N, H)
    packed = pack_params(*weights)

    losses = batched_loss_fn(z1, z2, packed, perm_idx)        # (B,)
    jax.block_until_ready(losses)

    for i in range(B):
        ref = reference_loss(z1[i], z2[i], weights, perm_idx[i])
        assert abs(float(losses[i]) - float(ref)) < 5e-2, (i, float(losses[i]), float(ref))

    # Single-instance path (exact BTModel.forward signature).
    l0 = loss_fn(z1[0], z2[0], packed, perm_idx[0])
    jax.block_until_ready(l0)
    assert abs(float(l0) - float(losses[0])) < 1e-5, (float(l0), float(losses[0]))

    print("KERNEL_OK")
</pallas_src>

<mosaic_0001>
module attributes {stable_mosaic.version = 11 : i64} {
  func.func @kernel(%arg0: i32, %arg1: memref<1x16x32xf32, #tpu.memory_space<vmem>>, %arg2: memref<128x64xbf16, #tpu.memory_space<vmem>>, %arg3: memref<1x8x1xi32, #tpu.memory_space<vmem>>, %arg4: memref<1x1x1xf32, #tpu.memory_space<vmem>>) attributes {dimension_semantics = [#tpu.dimension_semantics<parallel>], iteration_bounds = array<i64: 4>, scalar_prefetch = 0 : i64, scratch_operands = 0 : i64, tpu.core_type = #tpu.core_type<tc>, window_params = [{transform_indices = @transform_0, window_bounds = array<i64: 1, 16, 32>}, {pipeline_mode = #tpu.pipeline_mode<synchronous>, transform_indices = @transform_1, window_bounds = array<i64: 128, 64>}, {transform_indices = @transform_2, window_bounds = array<i64: 1, 8, 1>}, {transform_indices = @transform_3, window_bounds = array<i64: 1, 1, 1>}]} {
    %c0 = arith.constant 0 : index
    %c0_0 = arith.constant 0 : index
    %c0_1 = arith.constant 0 : index
    %0 = vector.load %arg1[%c0, %c0_0, %c0_1] : memref<1x16x32xf32, #tpu.memory_space<vmem>>, vector<1x16x32xf32>
    %1 = vector.shape_cast %0 : vector<1x16x32xf32> to vector<16x32xf32>
    %2 = arith.truncf %1 : vector<16x32xf32> to vector<16x32xbf16>
    %c0_2 = arith.constant 0 : index
    %c0_3 = arith.constant 0 : index
    %3 = vector.load %arg2[%c0_2, %c0_3] : memref<128x64xbf16, #tpu.memory_space<vmem>>, vector<32x64xbf16>
    %c32 = arith.constant 32 : index
    %c0_4 = arith.constant 0 : index
    %4 = vector.load %arg2[%c32, %c0_4] : memref<128x64xbf16, #tpu.memory_space<vmem>>, vector<1x64xbf16>
    %5 = arith.extf %4 : vector<1x64xbf16> to vector<1x64xf32>
    %c48 = arith.constant 48 : index
    %c0_5 = arith.constant 0 : index
    %6 = vector.load %arg2[%c48, %c0_5] : memref<128x64xbf16, #tpu.memory_space<vmem>>, vector<64x64xbf16>
    %c112 = arith.constant 112 : index
    %c0_6 = arith.constant 0 : index
    %7 = vector.load %arg2[%c112, %c0_6] : memref<128x64xbf16, #tpu.memory_space<vmem>>, vector<1x64xbf16>
    %8 = arith.extf %7 : vector<1x64xbf16> to vector<1x64xf32>
    %cst = arith.constant dense<0.000000e+00> : vector<16x64xf32>
    %9 = tpu.matmul %2, %3, %cst {dimension_numbers = #tpu.dot_dimension_numbers<[1], [0], [0], [1], [0, 0, 1, 1], [], []>} : vector<16x32xbf16>, vector<32x64xbf16>, vector<16x64xf32> -> vector<16x64xf32>
    %10 = vector.broadcast %5 : vector<1x64xf32> to vector<16x64xf32>
    %11 = arith.addf %9, %10 : vector<16x64xf32>
    %cst_7 = arith.constant 0.000000e+00 : f32
    %12 = vector.broadcast %cst_7 : f32 to vector<16x64xf32>
    %13 = arith.maximumf %11, %12 : vector<16x64xf32>
    %14 = arith.truncf %13 : vector<16x64xf32> to vector<16x64xbf16>
    %cst_8 = arith.constant dense<0.000000e+00> : vector<16x64xf32>
    %15 = tpu.matmul %14, %6, %cst_8 {dimension_numbers = #tpu.dot_dimension_numbers<[1], [0], [0], [1], [0, 0, 1, 1], [], []>} : vector<16x64xbf16>, vector<64x64xbf16>, vector<16x64xf32> -> vector<16x64xf32>
    %16 = vector.broadcast %8 : vector<1x64xf32> to vector<16x64xf32>
    %17 = arith.addf %15, %16 : vector<16x64xf32>
    %18 = vector.extract_strided_slice %17 {offsets = [0, 0], sizes = [8, 32], strides = [1, 1]} : vector<16x64xf32> to vector<8x32xf32>
    %19 = vector.extract_strided_slice %17 {offsets = [8, 32], sizes = [8, 32], strides = [1, 1]} : vector<16x64xf32> to vector<8x32xf32>
    %20 = arith.mulf %18, %18 : vector<8x32xf32>
    %cst_9 = arith.constant dense<0.000000e+00> : vector<8xf32>
    %21 = vector.multi_reduction <add>, %20, %cst_9 [1] : vector<8x32xf32> to vector<8xf32>
    %22 = vector.shape_cast %21 : vector<8xf32> to vector<8x1xf32>
    %cst_10 = arith.constant 1.000000e-24 : f32
    %23 = vector.broadcast %cst_10 : f32 to vector<8x1xf32>
    %24 = arith.maximumf %22, %23 : vector<8x1xf32>
    %25 = math.rsqrt %24 : vector<8x1xf32>
    %26 = vector.broadcast %25 : vector<8x1xf32> to vector<8x32xf32>
    %27 = arith.mulf %18, %26 : vector<8x32xf32>
    %28 = arith.mulf %19, %19 : vector<8x32xf32>
    %cst_11 = arith.constant dense<0.000000e+00> : vector<8xf32>
    %29 = vector.multi_reduction <add>, %28, %cst_11 [1] : vector<8x32xf32> to vector<8xf32>
    %30 = vector.shape_cast %29 : vector<8xf32> to vector<8x1xf32>
    %cst_12 = arith.constant 1.000000e-24 : f32
    %31 = vector.broadcast %cst_12 : f32 to vector<8x1xf32>
    %32 = arith.maximumf %30, %31 : vector<8x1xf32>
    %33 = math.rsqrt %32 : vector<8x1xf32>
    %34 = vector.broadcast %33 : vector<8x1xf32> to vector<8x32xf32>
    %35 = arith.mulf %19, %34 : vector<8x32xf32>
    %36 = arith.mulf %27, %35 : vector<8x32xf32>
    %cst_13 = arith.constant dense<0.000000e+00> : vector<8xf32>
    %37 = vector.multi_reduction <add>, %36, %cst_13 [1] : vector<8x32xf32> to vector<8xf32>
    %38 = vector.shape_cast %37 : vector<8xf32> to vector<8x1xf32>
    %39 = arith.truncf %27 : vector<8x32xf32> to vector<8x32xbf16>
    %40 = arith.truncf %35 : vector<8x32xf32> to vector<8x32xbf16>
    %cst_14 = arith.constant dense<0.000000e+00> : vector<8x8xf32>
    %41 = tpu.matmul %39, %40, %cst_14 {dimension_numbers = #tpu.dot_dimension_numbers<[1], [1], [0], [0], [0, 0, 1, 0], [], []>} : vector<8x32xbf16>, vector<8x32xbf16>, vector<8x8xf32> -> vector<8x8xf32>
    %42 = tpu.iota {dimensions = array<i32: 1>} : vector<8x8xi32>
    %c0_15 = arith.constant 0 : index
    %c0_16 = arith.constant 0 : index
    %c0_17 = arith.constant 0 : index
    %43 = vector.load %arg3[%c0_15, %c0_16, %c0_17] : memref<1x8x1xi32, #tpu.memory_space<vmem>>, vector<1x8x1xi32>
    %44 = vector.shape_cast %43 : vector<1x8x1xi32> to vector<8x1xi32>
    %45 = vector.broadcast %44 : vector<8x1xi32> to vector<8x8xi32>
    %46 = arith.cmpi eq, %42, %45 : vector<8x8xi32>
    %cst_18 = arith.constant 0.000000e+00 : f32
    %47 = vector.broadcast %cst_18 : f32 to vector<8x8xf32>
    %48 = arith.select %46, %41, %47 : vector<8x8xi1>, vector<8x8xf32>
    %cst_19 = arith.constant dense<0.000000e+00> : vector<8xf32>
    %49 = vector.multi_reduction <add>, %48, %cst_19 [1] : vector<8x8xf32> to vector<8xf32>
    %50 = vector.shape_cast %49 : vector<8xf32> to vector<8x1xf32>
    %51 = tpu.transpose %41, [1, 0] : vector<8x8xf32> -> vector<8x8xf32>
    %cst_20 = arith.constant 0.000000e+00 : f32
    %52 = vector.broadcast %cst_20 : f32 to vector<8x8xf32>
    %53 = arith.select %46, %51, %52 : vector<8x8xi1>, vector<8x8xf32>
    %cst_21 = arith.constant dense<0.000000e+00> : vector<8xf32>
    %54 = vector.multi_reduction <add>, %53, %cst_21 [1] : vector<8x8xf32> to vector<8xf32>
    %55 = vector.shape_cast %54 : vector<8xf32> to vector<8x1xf32>
    %cst_22 = arith.constant 1.42857146 : f32
    %56 = vector.broadcast %cst_22 : f32 to vector<8x1xf32>
    %57 = arith.mulf %38, %56 : vector<8x1xf32>
    %58 = math.exp %57 : vector<8x1xf32>
    %59 = arith.addf %58, %58 : vector<8x1xf32>
    %cst_23 = arith.constant 1.42857146 : f32
    %60 = vector.broadcast %cst_23 : f32 to vector<8x1xf32>
    %61 = arith.mulf %50, %60 : vector<8x1xf32>
    %62 = math.exp %61 : vector<8x1xf32>
    %63 = arith.addf %59, %62 : vector<8x1xf32>
    %cst_24 = arith.constant 1.42857146 : f32
    %64 = vector.broadcast %cst_24 : f32 to vector<8x1xf32>
    %65 = arith.mulf %55, %64 : vector<8x1xf32>
    %66 = math.exp %65 : vector<8x1xf32>
    %67 = arith.addf %63, %66 : vector<8x1xf32>
    %68 = math.log %67 : vector<8x1xf32>
    %cst_25 = arith.constant 1.42857146 : f32
    %69 = vector.broadcast %cst_25 : f32 to vector<8x1xf32>
    %70 = arith.mulf %38, %69 : vector<8x1xf32>
    %71 = arith.subf %68, %70 : vector<8x1xf32>
    %cst_26 = arith.constant dense<0.000000e+00> : vector<1xf32>
    %72 = vector.multi_reduction <add>, %71, %cst_26 [0] : vector<8x1xf32> to vector<1xf32>
    %73 = vector.shape_cast %72 : vector<1xf32> to vector<1x1xf32>
    %cst_27 = arith.constant 1.250000e-01 : f32
    %74 = vector.broadcast %cst_27 : f32 to vector<1x1xf32>
    %75 = arith.mulf %73, %74 : vector<1x1xf32>
    %c0_28 = arith.constant 0 : index
    %c0_29 = arith.constant 0 : index
    %c0_30 = arith.constant 0 : index
    %76 = vector.load %arg4[%c0_28, %c0_29, %c0_30] : memref<1x1x1xf32, #tpu.memory_space<vmem>>, vector<1x1x1xf32>
    %77 = vector.shape_cast %76 : vector<1x1x1xf32> to vector<1x1xf32>
    %78 = vector.shape_cast %75 : vector<1x1xf32> to vector<1x1x1xf32>
    tpu.vector_store %arg4[%c0_28, %c0_29, %c0_30], %78 {strides = array<i32>} : memref<1x1x1xf32, #tpu.memory_space<vmem>>, vector<1x1x1xf32>,
    return
  }
  func.func @transform_0(%arg0: i32) -> (i32, i32, i32) {
    %c0_i32 = arith.constant 0 : i32
    %c0_i32_0 = arith.constant 0 : i32
    %c0_i32_1 = arith.constant 0 : i32
    return %arg0, %c0_i32, %c0_i32_0 : i32, i32, i32
  }
  func.func @transform_1(%arg0: i32) -> (i32, i32) {
    %c0_i32 = arith.constant 0 : i32
    %c0_i32_0 = arith.constant 0 : i32
    %c0_i32_1 = arith.constant 0 : i32
    return %c0_i32, %c0_i32_0 : i32, i32
  }
  func.func @transform_2(%arg0: i32) -> (i32, i32, i32) {
    %c0_i32 = arith.constant 0 : i32
    %c0_i32_0 = arith.constant 0 : i32
    %c0_i32_1 = arith.constant 0 : i32
    return %arg0, %c0_i32, %c0_i32_0 : i32, i32, i32
  }
  func.func @transform_3(%arg0: i32) -> (i32, i32, i32) {
    %c0_i32 = arith.constant 0 : i32
    %c0_i32_0 = arith.constant 0 : i32
    %c0_i32_1 = arith.constant 0 : i32
    return %arg0, %c0_i32, %c0_i32_0 : i32, i32, i32
  }
}

</mosaic_0001>

<llo_original>
// kernel: batched_loss_fn.1
$region0: #{batched_loss_fn.1}
  #allocation0 [shape = 'u32[]', space=smem, size = 0x4, offset = 0x4, fixed_abs, tag = 'smem constant byte address 0x4 - core index']
  #allocation1 [shape = 'u32[72,128]{1,0:T(1,128)}', space=vmem, size = 0x9000, scoped, tag = 'internal scratch']
  %s0 = inlined_call_operand.vmem [shape: f32[4,16,32], index: 0, kind: input, shape index: {}]
  %s1 = inlined_call_operand.vmem [shape: bf16[128,64], index: 1, kind: input, shape index: {}]
  %s2 = inlined_call_operand.vmem [shape: s32[4,8,1], index: 2, kind: input, shape index: {}]
  %s3 = inlined_call_operand.vmem [shape: f32[4,1,1], index: 3, kind: output, shape index: {}]
  %s4 = sld [smem:[#allocation0]]
  $region45: #{batched_loss_fn.1} parent=0
    _
  %s6 = ssub.s32 1, %s4
  %s7 = scalar_select 0, %s6, %s4
  loop: start=0, step=1, limit=6
  $region2: #{batched_loss_fn.1} parent=0 // loop_pre_header
    _
  $region3: #{batched_loss_fn.1} parent=0 // loop_header
    %s9 = sphi 0, %s13
    %p10 = scmp.ge.s32.totalorder %s9, 6
    %s19 = sphi 0, %s21
    %s22 = sphi 0, %s19
    %s23 = sphi 0, %s22
    %s39 = sphi 0, %s23
    %s43 = sphi 0, %s43
    %s45 = sphi 0, %s43
    %s46 = sphi 0, %s45
    %s60 = sphi 0, %s46
    %s66 = sphi 0, %s68
    %s69 = sphi 0, %s66
    %s70 = sphi 0, %s69
    %s86 = sphi 0, %s70
    %s92 = sphi 0, %s94
    %s95 = sphi 0, %s92
    %s96 = sphi 0, %s95
    %s112 = sphi 0, %s96
  $region4: #{batched_loss_fn.1} parent=0 // loop_header_branch
    %12 = sbr.rel (%p10) target = $region8
  $region5: #{batched_loss_fn.1} parent=0 // loop_body
    %s14 = ssub.s32 %s9, 1
    %s15 = ssub.s32 %s9, 2
    %s16 = sadd.s32 %s9, 1
    %s17 = ssub.s32 %s9, %s16
    %p18 = scmp.eq.s32.totalorder %s17, 0
    %s20 = sadd.s32 %s19, 1
    %s21 = scalar_select %p18, %s19, %s20
    %p24 = pneg %p18
    %p25 = scmp.eq.s32.totalorder %s9, 3
    %p26 = por %p24, %p25
    %p27 = scmp.ne.s32.totalorder %s19, %s22
    %p28 = scmp.eq.s32.totalorder %s9, 0
    %p29 = por %p27, %p28
    %p30 = scmp.ne.s32.totalorder %s19, %s22
    %p31 = scmp.eq.s32.totalorder %s14, 3
    %p32 = por %p30, %p31
    %p33 = scmp.ne.s32.totalorder %s22, %s23
    %p34 = scmp.eq.s32.totalorder %s14, 0
    %p35 = por %p33, %p34
    %p36 = scmp.ne.s32.totalorder %s22, %s23
    %p37 = scmp.eq.s32.totalorder %s15, 3
    %p38 = por %p36, %p37
    %p40 = scmp.ne.s32.totalorder %s23, %s39
    %p41 = scmp.eq.s32.totalorder %s15, 0
    %p42 = por %p40, %p41
    %s44 = sadd.s32 %s43, 1
    %p47 = scmp.eq.s32.totalorder %s9, 3
    %p48 = scmp.ne.s32.totalorder %s43, %s45
    %p49 = scmp.eq.s32.totalorder %s9, 0
    %p50 = por %p48, %p49
    %p51 = scmp.ne.s32.totalorder %s43, %s45
    %p52 = scmp.eq.s32.totalorder %s14, 3
    %p53 = por %p51, %p52
    %p54 = scmp.ne.s32.totalorder %s45, %s46
    %p55 = scmp.eq.s32.totalorder %s14, 0
    %p56 = por %p54, %p55
    %p57 = scmp.ne.s32.totalorder %s45, %s46
    %p58 = scmp.eq.s32.totalorder %s15, 3
    %p59 = por %p57, %p58
    %p61 = scmp.ne.s32.totalorder %s46, %s60
    %p62 = scmp.eq.s32.totalorder %s15, 0
    %p63 = por %p61, %p62
    %s64 = ssub.s32 %s9, %s16
    %p65 = scmp.eq.s32.totalorder %s64, 0
    %s67 = sadd.s32 %s66, 1
    %s68 = scalar_select %p65, %s66, %s67
    %p71 = pneg %p65
    %p72 = scmp.eq.s32.totalorder %s9, 3
    %p73 = por %p71, %p72
    %p74 = scmp.ne.s32.totalorder %s66, %s69
    %p75 = scmp.eq.s32.totalorder %s9, 0
    %p76 = por %p74, %p75
    %p77 = scmp.ne.s32.totalorder %s66, %s69
    %p78 = scmp.eq.s32.totalorder %s14, 3
    %p79 = por %p77, %p78
    %p80 = scmp.ne.s32.totalorder %s69, %s70
    %p81 = scmp.eq.s32.totalorder %s14, 0
    %p82 = por %p80, %p81
    %p83 = scmp.ne.s32.totalorder %s69, %s70
    %p84 = scmp.eq.s32.totalorder %s15, 3
    %p85 = por %p83, %p84
    %p87 = scmp.ne.s32.totalorder %s70, %s86
    %p88 = scmp.eq.s32.totalorder %s15, 0
    %p89 = por %p87, %p88
    %s90 = ssub.s32 %s9, %s16
    %p91 = scmp.eq.s32.totalorder %s90, 0
    %s93 = sadd.s32 %s92, 1
    %s94 = scalar_select %p91, %s92, %s93
    %p97 = pneg %p91
    %p98 = scmp.eq.s32.totalorder %s9, 3
    %p99 = por %p97, %p98
    %p100 = scmp.ne.s32.totalorder %s92, %s95
    %p101 = scmp.eq.s32.totalorder %s9, 0
    %p102 = por %p100, %p101
    %p103 = scmp.ne.s32.totalorder %s92, %s95
    %p104 = scmp.eq.s32.totalorder %s14, 3
    %p105 = por %p103, %p104
    %p106 = scmp.ne.s32.totalorder %s95, %s96
    %p107 = scmp.eq.s32.totalorder %s14, 0
    %p108 = por %p106, %p107
    %p109 = scmp.ne.s32.totalorder %s95, %s96
    %p110 = scmp.eq.s32.totalorder %s15, 3
    %p111 = por %p109, %p110
    %p113 = scmp.ne.s32.totalorder %s96, %s112
    %p114 = scmp.eq.s32.totalorder %s15, 0
    %p115 = por %p113, %p114
    %p116 = scmp.le.s32.totalorder 1, %s9
    %p117 = scmp.lt.s32.totalorder %s9, 5
    %p118 = pnand %p116, %p117
    %p119 = pneg %p118
    // Predicated region
    $region9: #{batched_loss_fn.1} parent=5 // pred_check
      _
    $region10: #{batched_loss_fn.1} parent=5 // pred_check_branch
      %121 = sbr.rel (%p118) target = $region12
    $region11: #{batched_loss_fn.1} parent=5 // pred_region
      %s122 = ssub.s32 %s9, 1
      // Predicated region
      $region13: #{batched_loss_fn.1} parent=11 // pred_check
        %p123 = pneg %p56
      $region14: #{batched_loss_fn.1} parent=11 // pred_check_branch
        %125 = sbr.rel (%p123) target = $region16
      $region15: #{batched_loss_fn.1} parent=11 // pred_region
        _
      $region16: #{batched_loss_fn.1} parent=11 // pred_fallthru
        _
    $region12: #{batched_loss_fn.1} parent=5 // pred_fallthru
      _
    %p126 = scmp.lt.s32.totalorder %s9, 4
    // Predicated region
    $region17: #{batched_loss_fn.1} parent=5 // pred_check
      %p127 = pneg %p126
    $region18: #{batched_loss_fn.1} parent=5 // pred_check_branch
      %129 = sbr.rel (%p127) target = $region20
    $region19: #{batched_loss_fn.1} parent=5 // pred_region
      // Predicated region
      $region21: #{batched_loss_fn.1} parent=19 // pred_check
        %p130 = pneg %p29
      $region22: #{batched_loss_fn.1} parent=19 // pred_check_branch
        %132 = sbr.rel (%p130) target = $region24
      $region23: #{batched_loss_fn.1} parent=19 // pred_region
        %p133 = scmp.lt.s32.totalorder %s9, 3
        %s134 = scalar_select %p133, %s9, 3
        %s135 = smul.addr %s134, 2
        %s136 = smul.addr %s135, 8
        %s137 = scalar_lea.vmem %s0, %s136
      $region24: #{batched_loss_fn.1} parent=19 // pred_fallthru
        _
      // Predicated region
      $region25: #{batched_loss_fn.1} parent=19 // pred_check
        %p138 = pneg %p76
      $region26: #{batched_loss_fn.1} parent=19 // pred_check_branch
        %140 = sbr.rel (%p138) target = $region28
      $region27: #{batched_loss_fn.1} parent=19 // pred_region
        %p141 = scmp.lt.s32.totalorder %s9, 3
        %s142 = scalar_select %p141, %s9, 3
        %s143 = smul.addr %s142, 8
        %s144 = scalar_lea.vmem %s2, %s143
      $region28: #{batched_loss_fn.1} parent=19 // pred_fallthru
        _
    $region20: #{batched_loss_fn.1} parent=5 // pred_fallthru
      _
    %p145 = scmp.le.s32.totalorder 1, %s9
    %p146 = scmp.lt.s32.totalorder %s9, 5
    %p147 = pnand %p145, %p146
    %p148 = pneg %p147
    // Predicated region
    $region29: #{batched_loss_fn.1} parent=5 // pred_check
      _
    $region30: #{batched_loss_fn.1} parent=5 // pred_check_branch
      %150 = sbr.rel (%p147) target = $region32
    $region31: #{batched_loss_fn.1} parent=5 // pred_region
      %s151 = ssub.s32 %s9, 1
      %p152 = scmp.lt.s32.totalorder %s14, 3
      %s153 = scalar_select %p152, %s14, 3
      %s154 = smul.addr %s153, 2
      %s155 = smul.addr %s154, 8
      %s156 = scalar_lea.vmem %s0, %s155
      %p157 = pneg %p35
      %p158 = pneg %p32
      %p159 = pneg %p56
      %p160 = pneg %p53
      %p161 = scmp.lt.s32.totalorder %s14, 3
      %s162 = scalar_select %p161, %s14, 3
      %s163 = smul.addr %s162, 8
      %s164 = scalar_lea.vmem %s2, %s163
      %p165 = pneg %p82
      %p166 = pneg %p79
      %p167 = pneg %p108
      %p168 = pneg %p105
      %p169 = scmp.lt.s32.totalorder %s14, 3
      %s170 = scalar_select %p169, %s14, 3
      %s171 = scalar_lea.vmem %s3, %s170
      %p172 = scmp.lt.s32.totalorder %s14, 3
      %s173 = scalar_select %p172, %s14, 3
      %s174 = smul.addr %s173, 2
      %s175 = smul.addr %s174, 8
      %s176 = scalar_lea.vmem %s0, %s175
      %p177 = scmp.lt.s32.totalorder %s14, 3
      %s178 = scalar_select %p177, %s14, 3
      %s179 = smul.addr %s178, 8
      %s180 = scalar_lea.vmem %s2, %s179
      %p181 = scmp.lt.s32.totalorder %s14, 3
      %s182 = scalar_select %p181, %s14, 3
      %s183 = scalar_lea.vmem %s3, %s182
      %v185 = vld [vmem:[%s176] sm:$0xff]
      %v186 = vld [vmem:[%s176 + $0x8] sm:$0xff]
      %v187 = vpack.c.bf16 %v186, %v185
      %v188 = vld [vmem:[%s1] sm:$0xf]
      %v189 = vld [vmem:[%s1 + $0x4] sm:$0xf]
      %v190 = vld [vmem:[%s1 + $0x8] sm:$0xf]
      %v191 = vld [vmem:[%s1 + $0xc] sm:$0xf]
      %v192 = vld [vmem:[%s1 + $0x10] sm:$0x1]
      %v193 = vunpack.c.l.bf16 %v192
      %v194 = vld [vmem:[%s1 + $0x18] sm:$0xf]
      %v195 = vld [vmem:[%s1 + $0x1c] sm:$0xf]
      %v196 = vld [vmem:[%s1 + $0x20] sm:$0xf]
      %v197 = vld [vmem:[%s1 + $0x24] sm:$0xf]
      %v198 = vld [vmem:[%s1 + $0x28] sm:$0xf]
      %v199 = vld [vmem:[%s1 + $0x2c] sm:$0xf]
      %v200 = vld [vmem:[%s1 + $0x30] sm:$0xf]
      %v201 = vld [vmem:[%s1 + $0x34] sm:$0xf]
      %v202 = vld [vmem:[%s1 + $0x38] sm:$0x1]
      %v203 = vunpack.c.l.bf16 %v202
      %v204 = vperm.slane %v193, 0
      %v209 = vunpack.c.l.b16 %v188
      %v210 = vunpack.c.l.b16 %v189
      %v211 = vunpack.c.l.b16 %v190
      %v212 = vunpack.c.l.b16 %v191
      %v213 = vpack.c.b16 %v210, %v209
      %v214 = vpack.c.b16 %v212, %v211
      %vm217 = vcmask 261120
      %v219 = vsel %vm217, %v187, 0
      %221 = vmatpush.bf16.msra.mxu0 0
      %222 = vmatpush.bf16.msra.mxu0 0
      %223 = vmatpush.bf16.msra.mxu0 0
      %224 = vmatpush.bf16.msra.mxu0 0
      %225 = vmatpush.bf16.msra.mxu0 0
      %226 = vmatpush.bf16.msra.mxu0 0
      %227 = vmatpush.bf16.msra.mxu0 %v214
      %228 = vmatpush.bf16.msra.mxu0 %v213
      %229 = vmatmul.bf16.gmra.mxu0 %v219
      %v230 = vpop.f32.mrf.mxu0
      %v231 = vadd.f32 %v204, %v230
      %v232 = vpop.f32.mrf.mxu0
      %v233 = vadd.f32 %v204, %v232
      %234 = vdwg.mxu0
      %v235 = vmax.f32 %v231, 0.0
      %v236 = vmax.f32 %v233, 0.0
      %v237 = vpack.c.bf16 %v236, %v235
      %v238 = vperm.slane %v203, 0
      %v247 = vunpack.c.l.b16 %v194
      %v248 = vunpack.c.l.b16 %v195
      %v249 = vunpack.c.l.b16 %v196
      %v250 = vunpack.c.l.b16 %v197
      %v251 = vunpack.c.l.b16 %v198
      %v252 = vunpack.c.l.b16 %v199
      %v253 = vunpack.c.l.b16 %v200
      %v254 = vunpack.c.l.b16 %v201
      %v255 = vpack.c.b16 %v248, %v247
      %v256 = vpack.c.b16 %v250, %v249
      %v257 = vpack.c.b16 %v252, %v251
      %v258 = vpack.c.b16 %v254, %v253
      %vm263 = vcmask 523264
      %v265 = vsel %vm263, %v237, 0
      %267 = vmatpush.bf16.msra.mxu0 0
      %268 = vmatpush.bf16.msra.mxu0 0
      %269 = vmatpush.bf16.msra.mxu0 0
      %270 = vmatpush.bf16.msra.mxu0 0
      %271 = vmatpush.bf16.msra.mxu0 %v258
      %272 = vmatpush.bf16.msra.mxu0 %v257
      %273 = vmatpush.bf16.msra.mxu0 %v256
      %274 = vmatpush.bf16.msra.mxu0 %v255
      %275 = vmatmul.bf16.gmra.mxu0 %v265
      %v276 = vpop.f32.mrf.mxu0
      %v277 = vadd.f32 %v238, %v276
      %v278 = vpop.f32.mrf.mxu0
      %v279 = vadd.f32 %v238, %v278
      %280 = vdwg.mxu0
      %v281 = vmul.f32 %v277, %v277
      %v282 = vsel %vm217, %v281, 0.0
      %283 = vadd.xlane.f32.xlu0 %v282
      %v284 = vpop.xlane.xlu0 %283
      %v285 = vmax.f32 %v284, 1e-24
      %v286 = vrsqrt.pop %v285
      %v287 = vmul.f32 %v286, %v285
      %v288 = vmul.f32 %v287, %v286
      %v289 = vmul.f32 0.5, %v288
      %v290 = vsub.f32 1.5, %v289
      %v291 = vmul.f32 %v286, %v290
      %vm292 = vweird.f32 %v285
      %vm293 = vweird.f32 %v286
      %vm294 = vmor %vm292, %vm293
      %v295 = vsel %vm294, %v286, %v291
      %v296 = vmul.f32 %v277, %v295
      %v297 = vmul.f32 %v279, %v279
      %299 = vrot.lane.b32.xlu0 %v297, 96
      %v300 = vpop.permute.xlu0 %299
      %v302 = vsel %vm217, %v300, 0.0
      %303 = vadd.xlane.f32.xlu0 %v302
      %v304 = vpop.xlane.xlu0 %303
      %v305 = vmax.f32 %v304, 1e-24
      %v306 = vrsqrt.pop %v305
      %v307 = vmul.f32 %v306, %v305
      %v308 = vmul.f32 %v307, %v306
      %v309 = vmul.f32 0.5, %v308
      %v310 = vsub.f32 1.5, %v309
      %v311 = vmul.f32 %v306, %v310
      %vm312 = vweird.f32 %v305
      %vm313 = vweird.f32 %v306
      %vm314 = vmor %vm312, %vm313
      %v315 = vsel %vm314, %v306, %v311
      %v316 = vmul.f32 %v279, %v315
      %318 = vrot.lane.b32.xlu0 %v316, 96
      %v319 = vpop.permute.xlu0 %318
      %v321 = vmul.f32 %v296, %v319
      %v322 = vsel %vm217, %v321, 0.0
      %323 = vadd.xlane.f32.xlu0 %v322
      %v324 = vpop.xlane.xlu0 %323
      %v325 = vpack.c.bf16 %v296, %v296
      %v326 = vpack.c.bf16 %v316, %v316
      %328 = vrot.lane.b32.xlu0 %v326, 96
      %v329 = vpop.permute.xlu0 %328
      %v331 = vsel %vm217, %v325, 0
      %v334 = vsel %vm217, %v329, 0
      %336 = vmatpush.bf16.xpose.msra.mxu0 0
      %337 = vmatpush.bf16.xpose.msra.mxu0 0
      %338 = vmatpush.bf16.xpose.msra.mxu0 0
      %339 = vmatpush.bf16.xpose.msra.mxu0 0
      %340 = vmatpush.bf16.xpose.msra.mxu0 0
      %341 = vmatpush.bf16.xpose.msra.mxu0 0
      %342 = vmatpush.bf16.xpose.msra.mxu0 0
      %343 = vmatpush.bf16.xpose.msra.mxu0 %v334
      %344 = vmatmul.bf16.gmra.mxu0 %v331
      %v345 = vpop.f32.mrf.mxu0
      %v346 = vadd.f32 0.0, %v345
      %v347 = vpop.f32.mrf.mxu0
      %348 = vdwg.mxu0
      %v349 = vlaneseq
      %v350 = vand.u32 %v349, 127
      %v351 = vld [vmem:[%s180] sm:$0xff]
      %352 = vset.pattern.permute.xlu0 0
      %353 = vperm.xlu0 %352, %v351
      %v354 = vpop.permute.xlu0 %353
      %vm355 = vcmp.eq.s32.totalorder %v350, %v354
      %v356 = vsel %vm355, %v346, 0.0
      %vm357 = vcmask 64512
      %v358 = vsel %vm357, %v356, 0.0
      %359 = vadd.xlane.f32.xlu0 %v358
      %v360 = vpop.xlane.xlu0 %359
      %361 = vxpose.xlu0.b32.start [1/16] %v346, 128
      %362 = vxpose.xlu0.b32.cont [2/16] 0.0, 128
      %363 = vxpose.xlu0.b32.cont [3/16] 0.0, 128
      %364 = vxpose.xlu0.b32.cont [4/16] 0.0, 128
      %365 = vxpose.xlu0.b32.cont [5/16] 0.0, 128
      %366 = vxpose.xlu0.b32.cont [6/16] 0.0, 128
      %367 = vxpose.xlu0.b32.cont [7/16] 0.0, 128
      %368 = vxpose.xlu0.b32.cont [8/16] 0.0, 128
      %369 = vxpose.xlu0.b32.cont [9/16] 0.0, 128
      %370 = vxpose.xlu0.b32.cont [10/16] 0.0, 128
      %371 = vxpose.xlu0.b32.cont [11/16] 0.0, 128
      %372 = vxpose.xlu0.b32.cont [12/16] 0.0, 128
      %373 = vxpose.xlu0.b32.cont [13/16] 0.0, 128
      %374 = vxpose.xlu0.b32.cont [14/16] 0.0, 128
      %375 = vxpose.xlu0.b32.cont [15/16] 0.0, 128
      %376 = vxpose.xlu0.b32.end [16/16] 0.0, 128
      %v377 = vpop.trf.xlu0
      %v378 = vpop.trf.xlu0
      %v379 = vpop.trf.xlu0
      %v380 = vpop.trf.xlu0
      %v381 = vpop.trf.xlu0
      %v382 = vpop.trf.xlu0
      %v383 = vpop.trf.xlu0
      %v384 = vpop.trf.xlu0
      %v385 = vpop.trf.xlu0
      %v386 = vpop.trf.xlu0
      %v387 = vpop.trf.xlu0
      %v388 = vpop.trf.xlu0
      %v389 = vpop.trf.xlu0
      %v390 = vpop.trf.xlu0
      %v391 = vpop.trf.xlu0
      %v392 = vpop.trf.xlu0
      %v393 = vsel %vm355, %v377, 0.0
      %v394 = vsel %vm357, %v393, 0.0
      %395 = vadd.xlane.f32.xlu0 %v394
      %v396 = vpop.xlane.xlu0 %395
      %v397 = vmul.f32 %v324, 1.4285715
      %v398 = vmul.f32 %v397, 1.442695
      %v399 = vpow.pop %v398
      %v400 = vadd.f32 %v399, %v399
      %v401 = vmul.f32 %v360, 1.4285715
      %v402 = vmul.f32 %v401, 1.442695
      %v403 = vpow.pop %v402
      %v404 = vadd.f32 %v400, %v403
      %v405 = vmul.f32 %v396, 1.4285715
      %v406 = vmul.f32 %v405, 1.442695
      %v407 = vpow.pop %v406
      %v408 = vadd.f32 %v404, %v407
      %v409 = vlog2.pop %v408
      %v410 = vmul.f32 %v409, 0.6931472
      %v411 = vsub.f32 %v410, %v397
      %v412 = vrot.slane %v411, 4
      %v413 = vadd.f32 %v411, %v412
      %v414 = vrot.slane %v413, 2
      %v415 = vadd.f32 %v413, %v414
      %v416 = vrot.slane %v415, 1
      %v417 = vadd.f32 %v415, %v416
      %v418 = vmul.f32 %v417, 0.125
      %vm419 = vcmask 0
      %420 = vst.msk [vmem:[%s183] sm:$0x1] %vm419, %v418
      %p421 = scmp.lt.s32.totalorder %s14, 3
      %s422 = scalar_select %p421, %s14, 3
      %s423 = scalar_lea.vmem %s3, %s422
      // Predicated region
      $region33: #{batched_loss_fn.1} parent=31 // pred_check
        %p424 = pneg %p105
      $region34: #{batched_loss_fn.1} parent=31 // pred_check_branch
        %426 = sbr.rel (%p424) target = $region36
      $region35: #{batched_loss_fn.1} parent=31 // pred_region
        _
      $region36: #{batched_loss_fn.1} parent=31 // pred_fallthru
        _
    $region32: #{batched_loss_fn.1} parent=5 // pred_fallthru
      _
    %p427 = scmp.le.s32.totalorder 2, %s9
    // Predicated region
    $region37: #{batched_loss_fn.1} parent=5 // pred_check
      %p428 = pneg %p427
    $region38: #{batched_loss_fn.1} parent=5 // pred_check_branch
      %430 = sbr.rel (%p428) target = $region40
    $region39: #{batched_loss_fn.1} parent=5 // pred_region
      %s431 = ssub.s32 %s9, 2
      // Predicated region
      $region41: #{batched_loss_fn.1} parent=39 // pred_check
        %p432 = pneg %p111
      $region42: #{batched_loss_fn.1} parent=39 // pred_check_branch
        %434 = sbr.rel (%p432) target = $region44
      $region43: #{batched_loss_fn.1} parent=39 // pred_region
        %p435 = scmp.lt.s32.totalorder %s15, 3
        %s436 = scalar_select %p435, %s15, 3
        %s437 = scalar_lea.vmem %s3, %s436
      $region44: #{batched_loss_fn.1} parent=39 // pred_fallthru
        _
    $region40: #{batched_loss_fn.1} parent=5 // pred_fallthru
      _
  $region6: #{batched_loss_fn.1} parent=0 // loop_footer
    %s13 = sadd.s32 1, %s9
  $region7: #{batched_loss_fn.1} parent=0 // loop_footer_branch
    %8 = sbr.rel target = $region3
  $region8: #{batched_loss_fn.1} parent=0 // loop_exit
    _

</llo_original>
